<compile_context>
chip_gen: v5e
topology: v5e:2x2
jax: 0.10.0
libtpu: 0.0.40
codegen_flags: <defaults>
</compile_context>

<pallas_src>
import functools

import jax
import jax.numpy as jnp
from jax.experimental import pallas as pl
from jax.experimental.pallas import tpu as pltpu


# --------------------------------- helpers -----------------------------------


def _round_up(v, m):
    return (v + m - 1) // m * m


def _vmem_capacity_bytes():
    try:
        return int(pltpu.get_tpu_info().vmem_capacity_bytes)
    except Exception:
        return 64 * 1024 * 1024          # conservative (v7x-sized) fallback


# ------------------------- fused per-batch kernel -----------------------------


def _fused_ctx_kernel(x_ref,
                      mw1_ref, mb1_ref, mg_ref, mbt_ref, mw2_ref, mb2_ref,
                      aw1_ref, ab1_ref, ag_ref, abt_ref, aw2_ref, ab2_ref,
                      o_ref):
    """One image per grid step: avg-pool + both bottlenecks + gated FMA."""
    x = x_ref[0].astype(jnp.float32)                       # (C, HW) f32
    ctx = jnp.mean(x, axis=1, keepdims=True)               # (C, 1) global avg pool

    def bottleneck(w1t, b1, gamma, beta, w2, b2):
        # conv1x1 #1:  t[p] = sum_c ctx[c] * w1t[c, p]   (VPU mul + sublane reduce)
        t = jnp.sum(w1t * ctx, axis=0, keepdims=True) + b1            # (1, P)
        # LayerNorm([P, 1, 1]) == normalize over the P entries.
        mu = jnp.mean(t, axis=1, keepdims=True)
        var = jnp.mean(jnp.square(t - mu), axis=1, keepdims=True)
        t = (t - mu) * jax.lax.rsqrt(var + 1e-5) * gamma + beta
        t = jnp.maximum(t, 0.0)                                        # ReLU
        # conv1x1 #2:  g[c] = sum_p t[p] * w2[c, p]      (VPU mul + lane reduce)
        return jnp.sum(w2 * t, axis=1, keepdims=True) + b2             # (C, 1)

    mul_gate = bottleneck(mw1_ref[...], mb1_ref[...], mg_ref[...],
                          mbt_ref[...], mw2_ref[...], mb2_ref[...])
    mul = 1.0 / (1.0 + jnp.exp(-mul_gate))                             # sigmoid
    add = bottleneck(aw1_ref[...], ab1_ref[...], ag_ref[...],
                     abt_ref[...], aw2_ref[...], ab2_ref[...])
    o_ref[0] = (x * mul + add).astype(o_ref.dtype)


def _branch_inputs(p):
    """(w1^T, b1, gamma, beta, w2, b2) as f32 2-D arrays for the fused kernel."""
    w1 = p["w1"].astype(jnp.float32)          # (P, C)
    w2 = p["w2"].astype(jnp.float32)          # (C, P)
    P, C = w1.shape
    return (w1.T,                                             # (C, P)
            p["b1"].astype(jnp.float32).reshape(1, P),
            p["gamma"].astype(jnp.float32).reshape(1, P),
            p["beta"].astype(jnp.float32).reshape(1, P),
            w2,                                               # (C, P)
            p["b2"].astype(jnp.float32).reshape(C, 1))


def _run_fused(x3, params, vmem_cap, fused_need):
    B, C, HW = x3.shape
    mul_in = list(_branch_inputs(params["channel_mul"]))
    add_in = list(_branch_inputs(params["channel_add"]))
    small = mul_in + add_in

    def _const_spec(a):
        # Block index is constant across the batch grid -> fetched once.
        return pl.BlockSpec(a.shape, lambda b: (0, 0))

    vmem_limit = int(min(max(int(fused_need * 1.25), 16 << 20),
                         int(vmem_cap * 0.9)))

    out3 = pl.pallas_call(
        _fused_ctx_kernel,
        out_shape=jax.ShapeDtypeStruct((B, C, HW), x3.dtype),
        grid=(B,),
        in_specs=[pl.BlockSpec((1, C, HW), lambda b: (b, 0, 0))]
                 + [_const_spec(a) for a in small],
        out_specs=pl.BlockSpec((1, C, HW), lambda b: (b, 0, 0)),
        compiler_params=pltpu.CompilerParams(
            dimension_semantics=("parallel",),   # megacore across batch on v7x
            vmem_limit_bytes=vmem_limit),
    )(x3, *small)
    return out3


# --------------------- streaming fallback (gates hoisted) ---------------------


def _gate_fma_kernel(x_ref, mul_ref, add_ref, o_ref):
    x = x_ref[...].astype(jnp.float32)
    o_ref[...] = (x * mul_ref[...] + add_ref[...]).astype(o_ref.dtype)


def _pick_stream_tiles(rows, hw, itemsize):
    """Pick (row_tile, lane_tile) for the (B*C, H*W) streaming pass."""
    total = rows * hw * itemsize
    # ~1-2 MiB blocks: >= ~85% of the HBM roofline (measured on v6e at 512+
    # lanes) while guaranteeing many pipelined grid steps; never collapse the
    # whole tensor into a single block.
    tgt = int(min(2 << 20, max(total // 8, 8 * 128 * itemsize)))
    max_lanes = max(128, ((tgt // (8 * itemsize)) // 128) * 128)
    tl = hw if hw <= max_lanes else min(max_lanes, 2048)
    tl_pad = _round_up(tl, 128)
    tr = max(8, min((tgt // (tl_pad * itemsize)) // 8 * 8, _round_up(rows, 8)))
    # Keep >= 2 blocks on a parallel axis (v7x has 2 TensorCores) and avoid a
    # degenerate 1-step grid that serializes DMA / compute / writeback.
    if (total >= (256 << 10) and pl.cdiv(rows, tr) == 1
            and pl.cdiv(hw, tl) == 1 and rows > 8):
        tr = _round_up(pl.cdiv(rows, 2), 8)
    return tr, tl


def _bottleneck_xla(ctx, p):
    """conv1x1 -> LayerNorm -> ReLU -> conv1x1 on the pooled context (f32)."""
    hp = jax.lax.Precision.HIGHEST
    t = jnp.einsum("bc,pc->bp", ctx, p["w1"].astype(jnp.float32),
                   precision=hp) + p["b1"].astype(jnp.float32)
    mu = jnp.mean(t, axis=-1, keepdims=True)
    var = jnp.mean(jnp.square(t - mu), axis=-1, keepdims=True)
    t = (t - mu) * jax.lax.rsqrt(var + 1e-5)
    t = t * p["gamma"].astype(jnp.float32) + p["beta"].astype(jnp.float32)
    t = jnp.maximum(t, 0.0)
    return jnp.einsum("bp,cp->bc", t, p["w2"].astype(jnp.float32),
                      precision=hp) + p["b2"].astype(jnp.float32)


def _run_streaming(x3, params, vmem_cap):
    B, C, HW = x3.shape
    rows = B * C
    itemsize = jnp.dtype(x3.dtype).itemsize

    # Tiny per-image gate math hoisted to XLA (f32).
    ctx = jnp.mean(x3, axis=2, dtype=jnp.float32)                   # (B, C)
    mul = jax.nn.sigmoid(_bottleneck_xla(ctx, params["channel_mul"]))
    add = _bottleneck_xla(ctx, params["channel_add"])

    x2 = x3.reshape(rows, HW)            # native dtype, contiguous view
    mul2 = mul.reshape(rows, 1)
    add2 = add.reshape(rows, 1)

    tr, tl = _pick_stream_tiles(rows, HW, itemsize)
    # Row axis OUTER, lane axis inner (gate blocks invariant along inner axis).
    grid = (pl.cdiv(rows, tr), pl.cdiv(HW, tl))

    trp, tlp = _round_up(tr, 8), _round_up(tl, 128)
    blk_io = trp * tlp * itemsize            # one x / out block (native dtype)
    blk_gate = trp * 128 * 4                 # (tr, 1) f32, lane-padded
    f32_tmp = 2 * trp * tlp * 4              # in-kernel f32 widening + result
    need = 2 * 2 * blk_io + 2 * 2 * blk_gate + f32_tmp + (2 << 20)
    vmem_limit = int(min(max(need, 16 << 20), int(vmem_cap * 0.9)))

    out2 = pl.pallas_call(
        _gate_fma_kernel,
        out_shape=jax.ShapeDtypeStruct((rows, HW), x3.dtype),
        grid=grid,
        in_specs=[
            pl.BlockSpec((tr, tl), lambda r, l: (r, l)),
            # Gate block index (r, 0) does not change across inner lane steps
            # -> fetched once per row block, no re-DMA.
            pl.BlockSpec((tr, 1), lambda r, l: (r, 0)),
            pl.BlockSpec((tr, 1), lambda r, l: (r, 0)),
        ],
        out_specs=pl.BlockSpec((tr, tl), lambda r, l: (r, l)),
        compiler_params=pltpu.CompilerParams(
            dimension_semantics=("parallel", "parallel"),
            vmem_limit_bytes=vmem_limit),
    )(x2, mul2, add2)
    return out2.reshape(B, C, HW)


# --------------------------------- wrapper ------------------------------------


@functools.partial(jax.jit, static_argnames=("force_streaming",))
def context_block_pallas(x, params, force_streaming=False):
    B, C, H, W = x.shape
    HW = H * W
    itemsize = jnp.dtype(x.dtype).itemsize
    x3 = x.reshape(B, C, HW)

    vmem_cap = _vmem_capacity_bytes()

    # Fused-path feasibility (tightest on v7x's 64 MiB): double-buffered native
    # in+out blocks + in-kernel f32 widening temps + lane-padded params must
    # fit with headroom.
    c_pad, hw_pad = _round_up(C, 8), _round_up(HW, 128)
    blk_native = c_pad * hw_pad * itemsize
    blk_f32 = c_pad * hw_pad * 4
    P = params["channel_add"]["w1"].shape[0]
    p_pad = _round_up(P, 128)
    per_branch = (2 * c_pad * p_pad + c_pad * 128 + 3 * 8 * 128) * 4
    param_bytes = 2 * 2 * per_branch
    fused_need = 2 * 2 * blk_native + 2 * blk_f32 + param_bytes + (2 << 20)

    if force_streaming or fused_need > int(vmem_cap * 0.7):
        out3 = _run_streaming(x3, params, vmem_cap)
    else:
        out3 = _run_fused(x3, params, vmem_cap, fused_need)
    return out3.reshape(B, C, H, W)


# ----------------- pure-JAX reference (mirrors the PyTorch forward) -----------


def context_block_ref(x, params):
    xf = x.astype(jnp.float32)
    ctx = jnp.mean(xf, axis=(2, 3))                                 # (B, C)
    hp = jax.lax.Precision.HIGHEST

    def branch(p):
        t = jnp.einsum("bc,pc->bp", ctx, p["w1"], precision=hp) + p["b1"]
        mu = jnp.mean(t, axis=-1, keepdims=True)
        var = jnp.mean(jnp.square(t - mu), axis=-1, keepdims=True)
        t = (t - mu) * jax.lax.rsqrt(var + 1e-5) * p["gamma"] + p["beta"]
        t = jnp.maximum(t, 0.0)
        return jnp.einsum("bp,cp->bc", t, p["w2"], precision=hp) + p["b2"]

    mul_term = jax.nn.sigmoid(branch(params["channel_mul"]))
    add_term = branch(params["channel_add"])
    return xf * mul_term[:, :, None, None] + add_term[:, :, None, None]


# ------------------- deterministic parameter construction ---------------------


def _conv1x1_init(key, out_c, in_c, zero=False):
    if zero:
        return (jnp.zeros((out_c, in_c), jnp.float32),
                jnp.zeros((out_c,), jnp.float32))
    kw, kb = jax.random.split(key)
    bound = 1.0 / (in_c ** 0.5)
    w = jax.random.uniform(kw, (out_c, in_c), jnp.float32, -bound, bound)
    b = jax.random.uniform(kb, (out_c,), jnp.float32, -bound, bound)
    return w, b


def init_params(key, inplanes, planes, zero_last=True):
    # zero_last=True mirrors ContextBlock.reset_parameters(): the LAST conv of
    # each bottleneck is constant_init(val=0).
    ks = jax.random.split(key, 4)

    def branch(k1, k2):
        w1, b1 = _conv1x1_init(k1, planes, inplanes)
        w2, b2 = _conv1x1_init(k2, inplanes, planes, zero=zero_last)
        return dict(w1=w1, b1=b1,
                    gamma=jnp.ones((planes,), jnp.float32),
                    beta=jnp.zeros((planes,), jnp.float32),
                    w2=w2, b2=b2)

    return {"channel_add": branch(ks[0], ks[1]),
            "channel_mul": branch(ks[2], ks[3])}


if __name__ == "__main__":
    # ContextBlock(inplanes=64, ratio=1/32) -> planes=2, on a (2, 64, 16, 16) input.
    B, C, H, W = 2, 64, 16, 16
    planes = int(C * (1.0 / 32.0))                                  # = 2

    k_x, k_p = jax.random.split(jax.random.PRNGKey(0))
    x = jax.random.normal(k_x, (B, C, H, W), jnp.float32)

    # 1) Faithful init (last conv of each bottleneck zeroed) -> out == 0.5 * x.
    params = init_params(k_p, C, planes, zero_last=True)
    out = jax.block_until_ready(context_block_pallas(x, params))
    ref = context_block_ref(x, params)
    assert out.shape == (B, C, H, W) and out.dtype == x.dtype
    assert jnp.allclose(out, ref, atol=1e-5, rtol=1e-5), "mismatch (faithful init)"

    # 2) Random (non-degenerate) params: exercises the full in-kernel bottleneck.
    params2 = init_params(jax.random.PRNGKey(1), C, planes, zero_last=False)
    out2 = jax.block_until_ready(context_block_pallas(x, params2))
    ref2 = context_block_ref(x, params2)
    assert jnp.allclose(out2, ref2, atol=1e-4, rtol=1e-4), "mismatch (random init)"

    # 3) Native-dtype streaming: bf16 in -> bf16 out (no f32 copy of the map).
    xb = x.astype(jnp.bfloat16)
    outb = jax.block_until_ready(context_block_pallas(xb, params2))
    assert outb.dtype == jnp.bfloat16
    refb = context_block_ref(xb, params2)
    assert jnp.allclose(outb.astype(jnp.float32), refb, atol=2e-2, rtol=2e-2), \
        "mismatch (bf16 path)"

    # 4) Ragged shapes (C not a multiple of 8, H*W not a multiple of 128).
    x3 = jax.random.normal(jax.random.PRNGKey(2), (1, 20, 7, 9), jnp.float32)
    params3 = init_params(jax.random.PRNGKey(3), 20, 4, zero_last=False)
    out3 = jax.block_until_ready(context_block_pallas(x3, params3))
    ref3 = context_block_ref(x3, params3)
    assert jnp.allclose(out3, ref3, atol=1e-4, rtol=1e-4), "mismatch (ragged)"

    # 5) Forced streaming fallback: exercises the tiled gate-FMA kernel and its
    #    multi-step pipelined grid.
    out4 = jax.block_until_ready(
        context_block_pallas(x, params2, force_streaming=True))
    assert jnp.allclose(out4, ref2, atol=1e-4, rtol=1e-4), "mismatch (streaming)"

    print("KERNEL_OK")
</pallas_src>

<mosaic_0001>
module attributes {stable_mosaic.version = 11 : i64} {
  func.func @_fused_ctx_kernel(%arg0: i32, %arg1: memref<1x64x256xf32, #tpu.memory_space<vmem>>, %arg2: memref<64x2xf32, #tpu.memory_space<vmem>>, %arg3: memref<1x2xf32, #tpu.memory_space<vmem>>, %arg4: memref<1x2xf32, #tpu.memory_space<vmem>>, %arg5: memref<1x2xf32, #tpu.memory_space<vmem>>, %arg6: memref<64x2xf32, #tpu.memory_space<vmem>>, %arg7: memref<64x1xf32, #tpu.memory_space<vmem>>, %arg8: memref<64x2xf32, #tpu.memory_space<vmem>>, %arg9: memref<1x2xf32, #tpu.memory_space<vmem>>, %arg10: memref<1x2xf32, #tpu.memory_space<vmem>>, %arg11: memref<1x2xf32, #tpu.memory_space<vmem>>, %arg12: memref<64x2xf32, #tpu.memory_space<vmem>>, %arg13: memref<64x1xf32, #tpu.memory_space<vmem>>, %arg14: memref<1x64x256xf32, #tpu.memory_space<vmem>>) attributes {dimension_semantics = [#tpu.dimension_semantics<parallel>], iteration_bounds = array<i64: 2>, scalar_prefetch = 0 : i64, scratch_operands = 0 : i64, tpu.core_type = #tpu.core_type<tc>, window_params = [{transform_indices = @transform_0, window_bounds = array<i64: 1, 64, 256>}, {pipeline_mode = #tpu.pipeline_mode<synchronous>, transform_indices = @transform_1, window_bounds = array<i64: 64, 2>}, {pipeline_mode = #tpu.pipeline_mode<synchronous>, transform_indices = @transform_2, window_bounds = array<i64: 1, 2>}, {pipeline_mode = #tpu.pipeline_mode<synchronous>, transform_indices = @transform_3, window_bounds = array<i64: 1, 2>}, {pipeline_mode = #tpu.pipeline_mode<synchronous>, transform_indices = @transform_4, window_bounds = array<i64: 1, 2>}, {pipeline_mode = #tpu.pipeline_mode<synchronous>, transform_indices = @transform_5, window_bounds = array<i64: 64, 2>}, {pipeline_mode = #tpu.pipeline_mode<synchronous>, transform_indices = @transform_6, window_bounds = array<i64: 64, 1>}, {pipeline_mode = #tpu.pipeline_mode<synchronous>, transform_indices = @transform_7, window_bounds = array<i64: 64, 2>}, {pipeline_mode = #tpu.pipeline_mode<synchronous>, transform_indices = @transform_8, window_bounds = array<i64: 1, 2>}, {pipeline_mode = #tpu.pipeline_mode<synchronous>, transform_indices = @transform_9, window_bounds = array<i64: 1, 2>}, {pipeline_mode = #tpu.pipeline_mode<synchronous>, transform_indices = @transform_10, window_bounds = array<i64: 1, 2>}, {pipeline_mode = #tpu.pipeline_mode<synchronous>, transform_indices = @transform_11, window_bounds = array<i64: 64, 2>}, {pipeline_mode = #tpu.pipeline_mode<synchronous>, transform_indices = @transform_12, window_bounds = array<i64: 64, 1>}, {transform_indices = @transform_13, window_bounds = array<i64: 1, 64, 256>}]} {
    %c0 = arith.constant 0 : index
    %c0_0 = arith.constant 0 : index
    %c0_1 = arith.constant 0 : index
    %0 = vector.load %arg1[%c0, %c0_0, %c0_1] : memref<1x64x256xf32, #tpu.memory_space<vmem>>, vector<1x64x256xf32>
    %1 = vector.shape_cast %0 : vector<1x64x256xf32> to vector<64x256xf32>
    %cst = arith.constant dense<0.000000e+00> : vector<64xf32>
    %2 = vector.multi_reduction <add>, %1, %cst [1] : vector<64x256xf32> to vector<64xf32>
    %3 = vector.shape_cast %2 : vector<64xf32> to vector<64x1xf32>
    %cst_2 = arith.constant 2.560000e+02 : f32
    %4 = vector.broadcast %cst_2 : f32 to vector<64x1xf32>
    %5 = arith.divf %3, %4 : vector<64x1xf32>
    %c0_3 = arith.constant 0 : index
    %c0_4 = arith.constant 0 : index
    %6 = vector.load %arg2[%c0_3, %c0_4] : memref<64x2xf32, #tpu.memory_space<vmem>>, vector<64x2xf32>
    %c0_5 = arith.constant 0 : index
    %c0_6 = arith.constant 0 : index
    %7 = vector.load %arg3[%c0_5, %c0_6] : memref<1x2xf32, #tpu.memory_space<vmem>>, vector<1x2xf32>
    %c0_7 = arith.constant 0 : index
    %c0_8 = arith.constant 0 : index
    %8 = vector.load %arg4[%c0_7, %c0_8] : memref<1x2xf32, #tpu.memory_space<vmem>>, vector<1x2xf32>
    %c0_9 = arith.constant 0 : index
    %c0_10 = arith.constant 0 : index
    %9 = vector.load %arg5[%c0_9, %c0_10] : memref<1x2xf32, #tpu.memory_space<vmem>>, vector<1x2xf32>
    %c0_11 = arith.constant 0 : index
    %c0_12 = arith.constant 0 : index
    %10 = vector.load %arg6[%c0_11, %c0_12] : memref<64x2xf32, #tpu.memory_space<vmem>>, vector<64x2xf32>
    %c0_13 = arith.constant 0 : index
    %c0_14 = arith.constant 0 : index
    %11 = vector.load %arg7[%c0_13, %c0_14] : memref<64x1xf32, #tpu.memory_space<vmem>>, vector<64x1xf32>
    %12 = vector.broadcast %5 : vector<64x1xf32> to vector<64x2xf32>
    %13 = arith.mulf %6, %12 : vector<64x2xf32>
    %cst_15 = arith.constant dense<0.000000e+00> : vector<2xf32>
    %14 = vector.multi_reduction <add>, %13, %cst_15 [0] : vector<64x2xf32> to vector<2xf32>
    %15 = vector.shape_cast %14 : vector<2xf32> to vector<1x2xf32>
    %16 = arith.addf %15, %7 : vector<1x2xf32>
    %cst_16 = arith.constant dense<0.000000e+00> : vector<1xf32>
    %17 = vector.multi_reduction <add>, %16, %cst_16 [1] : vector<1x2xf32> to vector<1xf32>
    %18 = vector.shape_cast %17 : vector<1xf32> to vector<1x1xf32>
    %cst_17 = arith.constant 2.000000e+00 : f32
    %19 = vector.broadcast %cst_17 : f32 to vector<1x1xf32>
    %20 = arith.divf %18, %19 : vector<1x1xf32>
    %21 = vector.broadcast %20 : vector<1x1xf32> to vector<1x2xf32>
    %22 = arith.subf %16, %21 : vector<1x2xf32>
    %23 = arith.mulf %22, %22 : vector<1x2xf32>
    %cst_18 = arith.constant dense<0.000000e+00> : vector<1xf32>
    %24 = vector.multi_reduction <add>, %23, %cst_18 [1] : vector<1x2xf32> to vector<1xf32>
    %25 = vector.shape_cast %24 : vector<1xf32> to vector<1x1xf32>
    %cst_19 = arith.constant 2.000000e+00 : f32
    %26 = vector.broadcast %cst_19 : f32 to vector<1x1xf32>
    %27 = arith.divf %25, %26 : vector<1x1xf32>
    %28 = vector.broadcast %20 : vector<1x1xf32> to vector<1x2xf32>
    %29 = arith.subf %16, %28 : vector<1x2xf32>
    %cst_20 = arith.constant 9.99999974E-6 : f32
    %30 = vector.broadcast %cst_20 : f32 to vector<1x1xf32>
    %31 = arith.addf %27, %30 : vector<1x1xf32>
    %32 = math.rsqrt %31 : vector<1x1xf32>
    %33 = vector.broadcast %32 : vector<1x1xf32> to vector<1x2xf32>
    %34 = arith.mulf %29, %33 : vector<1x2xf32>
    %35 = arith.mulf %34, %8 : vector<1x2xf32>
    %36 = arith.addf %35, %9 : vector<1x2xf32>
    %cst_21 = arith.constant 0.000000e+00 : f32
    %37 = vector.broadcast %cst_21 : f32 to vector<1x2xf32>
    %38 = arith.maximumf %36, %37 : vector<1x2xf32>
    %39 = vector.broadcast %38 : vector<1x2xf32> to vector<64x2xf32>
    %40 = arith.mulf %10, %39 : vector<64x2xf32>
    %cst_22 = arith.constant dense<0.000000e+00> : vector<64xf32>
    %41 = vector.multi_reduction <add>, %40, %cst_22 [1] : vector<64x2xf32> to vector<64xf32>
    %42 = vector.shape_cast %41 : vector<64xf32> to vector<64x1xf32>
    %43 = arith.addf %42, %11 : vector<64x1xf32>
    %cst_23 = arith.constant 0.000000e+00 : f32
    %44 = vector.broadcast %cst_23 : f32 to vector<64x1xf32>
    %45 = arith.subf %44, %43 : vector<64x1xf32>
    %46 = math.exp %45 : vector<64x1xf32>
    %cst_24 = arith.constant 1.000000e+00 : f32
    %47 = vector.broadcast %cst_24 : f32 to vector<64x1xf32>
    %48 = arith.addf %47, %46 : vector<64x1xf32>
    %cst_25 = arith.constant 1.000000e+00 : f32
    %49 = vector.broadcast %cst_25 : f32 to vector<64x1xf32>
    %50 = arith.divf %49, %48 : vector<64x1xf32>
    %c0_26 = arith.constant 0 : index
    %c0_27 = arith.constant 0 : index
    %51 = vector.load %arg8[%c0_26, %c0_27] : memref<64x2xf32, #tpu.memory_space<vmem>>, vector<64x2xf32>
    %c0_28 = arith.constant 0 : index
    %c0_29 = arith.constant 0 : index
    %52 = vector.load %arg9[%c0_28, %c0_29] : memref<1x2xf32, #tpu.memory_space<vmem>>, vector<1x2xf32>
    %c0_30 = arith.constant 0 : index
    %c0_31 = arith.constant 0 : index
    %53 = vector.load %arg10[%c0_30, %c0_31] : memref<1x2xf32, #tpu.memory_space<vmem>>, vector<1x2xf32>
    %c0_32 = arith.constant 0 : index
    %c0_33 = arith.constant 0 : index
    %54 = vector.load %arg11[%c0_32, %c0_33] : memref<1x2xf32, #tpu.memory_space<vmem>>, vector<1x2xf32>
    %c0_34 = arith.constant 0 : index
    %c0_35 = arith.constant 0 : index
    %55 = vector.load %arg12[%c0_34, %c0_35] : memref<64x2xf32, #tpu.memory_space<vmem>>, vector<64x2xf32>
    %c0_36 = arith.constant 0 : index
    %c0_37 = arith.constant 0 : index
    %56 = vector.load %arg13[%c0_36, %c0_37] : memref<64x1xf32, #tpu.memory_space<vmem>>, vector<64x1xf32>
    %57 = vector.broadcast %5 : vector<64x1xf32> to vector<64x2xf32>
    %58 = arith.mulf %51, %57 : vector<64x2xf32>
    %cst_38 = arith.constant dense<0.000000e+00> : vector<2xf32>
    %59 = vector.multi_reduction <add>, %58, %cst_38 [0] : vector<64x2xf32> to vector<2xf32>
    %60 = vector.shape_cast %59 : vector<2xf32> to vector<1x2xf32>
    %61 = arith.addf %60, %52 : vector<1x2xf32>
    %cst_39 = arith.constant dense<0.000000e+00> : vector<1xf32>
    %62 = vector.multi_reduction <add>, %61, %cst_39 [1] : vector<1x2xf32> to vector<1xf32>
    %63 = vector.shape_cast %62 : vector<1xf32> to vector<1x1xf32>
    %cst_40 = arith.constant 2.000000e+00 : f32
    %64 = vector.broadcast %cst_40 : f32 to vector<1x1xf32>
    %65 = arith.divf %63, %64 : vector<1x1xf32>
    %66 = vector.broadcast %65 : vector<1x1xf32> to vector<1x2xf32>
    %67 = arith.subf %61, %66 : vector<1x2xf32>
    %68 = arith.mulf %67, %67 : vector<1x2xf32>
    %cst_41 = arith.constant dense<0.000000e+00> : vector<1xf32>
    %69 = vector.multi_reduction <add>, %68, %cst_41 [1] : vector<1x2xf32> to vector<1xf32>
    %70 = vector.shape_cast %69 : vector<1xf32> to vector<1x1xf32>
    %cst_42 = arith.constant 2.000000e+00 : f32
    %71 = vector.broadcast %cst_42 : f32 to vector<1x1xf32>
    %72 = arith.divf %70, %71 : vector<1x1xf32>
    %73 = vector.broadcast %65 : vector<1x1xf32> to vector<1x2xf32>
    %74 = arith.subf %61, %73 : vector<1x2xf32>
    %cst_43 = arith.constant 9.99999974E-6 : f32
    %75 = vector.broadcast %cst_43 : f32 to vector<1x1xf32>
    %76 = arith.addf %72, %75 : vector<1x1xf32>
    %77 = math.rsqrt %76 : vector<1x1xf32>
    %78 = vector.broadcast %77 : vector<1x1xf32> to vector<1x2xf32>
    %79 = arith.mulf %74, %78 : vector<1x2xf32>
    %80 = arith.mulf %79, %53 : vector<1x2xf32>
    %81 = arith.addf %80, %54 : vector<1x2xf32>
    %cst_44 = arith.constant 0.000000e+00 : f32
    %82 = vector.broadcast %cst_44 : f32 to vector<1x2xf32>
    %83 = arith.maximumf %81, %82 : vector<1x2xf32>
    %84 = vector.broadcast %83 : vector<1x2xf32> to vector<64x2xf32>
    %85 = arith.mulf %55, %84 : vector<64x2xf32>
    %cst_45 = arith.constant dense<0.000000e+00> : vector<64xf32>
    %86 = vector.multi_reduction <add>, %85, %cst_45 [1] : vector<64x2xf32> to vector<64xf32>
    %87 = vector.shape_cast %86 : vector<64xf32> to vector<64x1xf32>
    %88 = arith.addf %87, %56 : vector<64x1xf32>
    %89 = vector.broadcast %50 : vector<64x1xf32> to vector<64x256xf32>
    %90 = arith.mulf %1, %89 : vector<64x256xf32>
    %91 = vector.broadcast %88 : vector<64x1xf32> to vector<64x256xf32>
    %92 = arith.addf %90, %91 : vector<64x256xf32>
    %c0_46 = arith.constant 0 : index
    %c0_47 = arith.constant 0 : index
    %c0_48 = arith.constant 0 : index
    %93 = vector.load %arg14[%c0_46, %c0_47, %c0_48] : memref<1x64x256xf32, #tpu.memory_space<vmem>>, vector<1x64x256xf32>
    %94 = vector.shape_cast %93 : vector<1x64x256xf32> to vector<64x256xf32>
    %95 = vector.shape_cast %92 : vector<64x256xf32> to vector<1x64x256xf32>
    tpu.vector_store %arg14[%c0_46, %c0_47, %c0_48], %95 {strides = array<i32>} : memref<1x64x256xf32, #tpu.memory_space<vmem>>, vector<1x64x256xf32>,
    return
  }
  func.func @transform_0(%arg0: i32) -> (i32, i32, i32) {
    %c0_i32 = arith.constant 0 : i32
    %c0_i32_0 = arith.constant 0 : i32
    %c0_i32_1 = arith.constant 0 : i32
    return %arg0, %c0_i32, %c0_i32_0 : i32, i32, i32
  }
  func.func @transform_1(%arg0: i32) -> (i32, i32) {
    %c0_i32 = arith.constant 0 : i32
    %c0_i32_0 = arith.constant 0 : i32
    %c0_i32_1 = arith.constant 0 : i32
    return %c0_i32, %c0_i32_0 : i32, i32
  }
  func.func @transform_2(%arg0: i32) -> (i32, i32) {
    %c0_i32 = arith.constant 0 : i32
    %c0_i32_0 = arith.constant 0 : i32
    %c0_i32_1 = arith.constant 0 : i32
    return %c0_i32, %c0_i32_0 : i32, i32
  }
  func.func @transform_3(%arg0: i32) -> (i32, i32) {
    %c0_i32 = arith.constant 0 : i32
    %c0_i32_0 = arith.constant 0 : i32
    %c0_i32_1 = arith.constant 0 : i32
    return %c0_i32, %c0_i32_0 : i32, i32
  }
  func.func @transform_4(%arg0: i32) -> (i32, i32) {
    %c0_i32 = arith.constant 0 : i32
    %c0_i32_0 = arith.constant 0 : i32
    %c0_i32_1 = arith.constant 0 : i32
    return %c0_i32, %c0_i32_0 : i32, i32
  }
  func.func @transform_5(%arg0: i32) -> (i32, i32) {
    %c0_i32 = arith.constant 0 : i32
    %c0_i32_0 = arith.constant 0 : i32
    %c0_i32_1 = arith.constant 0 : i32
    return %c0_i32, %c0_i32_0 : i32, i32
  }
  func.func @transform_6(%arg0: i32) -> (i32, i32) {
    %c0_i32 = arith.constant 0 : i32
    %c0_i32_0 = arith.constant 0 : i32
    %c0_i32_1 = arith.constant 0 : i32
    return %c0_i32, %c0_i32_0 : i32, i32
  }
  func.func @transform_7(%arg0: i32) -> (i32, i32) {
    %c0_i32 = arith.constant 0 : i32
    %c0_i32_0 = arith.constant 0 : i32
    %c0_i32_1 = arith.constant 0 : i32
    return %c0_i32, %c0_i32_0 : i32, i32
  }
  func.func @transform_8(%arg0: i32) -> (i32, i32) {
    %c0_i32 = arith.constant 0 : i32
    %c0_i32_0 = arith.constant 0 : i32
    %c0_i32_1 = arith.constant 0 : i32
    return %c0_i32, %c0_i32_0 : i32, i32
  }
  func.func @transform_9(%arg0: i32) -> (i32, i32) {
    %c0_i32 = arith.constant 0 : i32
    %c0_i32_0 = arith.constant 0 : i32
    %c0_i32_1 = arith.constant 0 : i32
    return %c0_i32, %c0_i32_0 : i32, i32
  }
  func.func @transform_10(%arg0: i32) -> (i32, i32) {
    %c0_i32 = arith.constant 0 : i32
    %c0_i32_0 = arith.constant 0 : i32
    %c0_i32_1 = arith.constant 0 : i32
    return %c0_i32, %c0_i32_0 : i32, i32
  }
  func.func @transform_11(%arg0: i32) -> (i32, i32) {
    %c0_i32 = arith.constant 0 : i32
    %c0_i32_0 = arith.constant 0 : i32
    %c0_i32_1 = arith.constant 0 : i32
    return %c0_i32, %c0_i32_0 : i32, i32
  }
  func.func @transform_12(%arg0: i32) -> (i32, i32) {
    %c0_i32 = arith.constant 0 : i32
    %c0_i32_0 = arith.constant 0 : i32
    %c0_i32_1 = arith.constant 0 : i32
    return %c0_i32, %c0_i32_0 : i32, i32
  }
  func.func @transform_13(%arg0: i32) -> (i32, i32, i32) {
    %c0_i32 = arith.constant 0 : i32
    %c0_i32_0 = arith.constant 0 : i32
    %c0_i32_1 = arith.constant 0 : i32
    return %arg0, %c0_i32, %c0_i32_0 : i32, i32, i32
  }
}

</mosaic_0001>

<llo_original>
// kernel: context_block_pallas.1
$region0: #{context_block_pallas.1}
  #allocation0 [shape = 'u32[]', space=smem, size = 0x4, offset = 0x4, fixed_abs, tag = 'smem constant byte address 0x4 - core index']
  #allocation1 [shape = 'u32[72,128]{1,0:T(1,128)}', space=vmem, size = 0x9000, scoped, tag = 'internal scratch']
  %s0 = inlined_call_operand.vmem [shape: f32[2,64,256], index: 0, kind: input, shape index: {}]
  %s1 = inlined_call_operand.vmem [shape: f32[64,2], index: 1, kind: input, shape index: {}]
  %s2 = inlined_call_operand.vmem [shape: f32[1,2], index: 2, kind: input, shape index: {}]
  %s3 = inlined_call_operand.vmem [shape: f32[1,2], index: 3, kind: input, shape index: {}]
  %s4 = inlined_call_operand.vmem [shape: f32[1,2], index: 4, kind: input, shape index: {}]
  %s5 = inlined_call_operand.vmem [shape: f32[64,2], index: 5, kind: input, shape index: {}]
  %s6 = inlined_call_operand.vmem [shape: f32[64,1], index: 6, kind: input, shape index: {}]
  %s7 = inlined_call_operand.vmem [shape: f32[64,2], index: 7, kind: input, shape index: {}]
  %s8 = inlined_call_operand.vmem [shape: f32[1,2], index: 8, kind: input, shape index: {}]
  %s9 = inlined_call_operand.vmem [shape: f32[1,2], index: 9, kind: input, shape index: {}]
  %s10 = inlined_call_operand.vmem [shape: f32[1,2], index: 10, kind: input, shape index: {}]
  %s11 = inlined_call_operand.vmem [shape: f32[64,2], index: 11, kind: input, shape index: {}]
  %s12 = inlined_call_operand.vmem [shape: f32[64,1], index: 12, kind: input, shape index: {}]
  %s13 = inlined_call_operand.vmem [shape: f32[2,64,256], index: 13, kind: output, shape index: {}]
  %s14 = sld [smem:[#allocation0]]
  $region85: #{context_block_pallas.1} parent=0
    _
  %s16 = ssub.s32 1, %s14
  %s17 = scalar_select 0, %s16, %s14
  loop: start=0, step=1, limit=4
  $region2: #{context_block_pallas.1} parent=0 // loop_pre_header
    _
  $region3: #{context_block_pallas.1} parent=0 // loop_header
    %s19 = sphi 0, %s23
    %p20 = scmp.ge.s32.totalorder %s19, 4
    %s29 = sphi 0, %s31
    %s32 = sphi 0, %s29
    %s33 = sphi 0, %s32
    %s49 = sphi 0, %s33
    %s53 = sphi 0, %s53
    %s55 = sphi 0, %s53
    %s56 = sphi 0, %s55
    %s70 = sphi 0, %s56
    %s74 = sphi 0, %s74
    %s76 = sphi 0, %s74
    %s77 = sphi 0, %s76
    %s91 = sphi 0, %s77
    %s95 = sphi 0, %s95
    %s97 = sphi 0, %s95
    %s98 = sphi 0, %s97
    %s112 = sphi 0, %s98
    %s116 = sphi 0, %s116
    %s118 = sphi 0, %s116
    %s119 = sphi 0, %s118
    %s133 = sphi 0, %s119
    %s137 = sphi 0, %s137
    %s139 = sphi 0, %s137
    %s140 = sphi 0, %s139
    %s154 = sphi 0, %s140
    %s158 = sphi 0, %s158
    %s160 = sphi 0, %s158
    %s161 = sphi 0, %s160
    %s175 = sphi 0, %s161
    %s179 = sphi 0, %s179
    %s181 = sphi 0, %s179
    %s182 = sphi 0, %s181
    %s196 = sphi 0, %s182
    %s200 = sphi 0, %s200
    %s202 = sphi 0, %s200
    %s203 = sphi 0, %s202
    %s217 = sphi 0, %s203
    %s221 = sphi 0, %s221
    %s223 = sphi 0, %s221
    %s224 = sphi 0, %s223
    %s238 = sphi 0, %s224
    %s242 = sphi 0, %s242
    %s244 = sphi 0, %s242
    %s245 = sphi 0, %s244
    %s259 = sphi 0, %s245
    %s263 = sphi 0, %s263
    %s265 = sphi 0, %s263
    %s266 = sphi 0, %s265
    %s280 = sphi 0, %s266
    %s284 = sphi 0, %s284
    %s286 = sphi 0, %s284
    %s287 = sphi 0, %s286
    %s301 = sphi 0, %s287
    %s307 = sphi 0, %s309
    %s310 = sphi 0, %s307
    %s311 = sphi 0, %s310
    %s327 = sphi 0, %s311
  $region4: #{context_block_pallas.1} parent=0 // loop_header_branch
    %22 = sbr.rel (%p20) target = $region8
  $region5: #{context_block_pallas.1} parent=0 // loop_body
    %s24 = ssub.s32 %s19, 1
    %s25 = ssub.s32 %s19, 2
    %s26 = sadd.s32 %s19, 1
    %s27 = ssub.s32 %s19, %s26
    %p28 = scmp.eq.s32.totalorder %s27, 0
    %s30 = sadd.s32 %s29, 1
    %s31 = scalar_select %p28, %s29, %s30
    %p34 = pneg %p28
    %p35 = scmp.eq.s32.totalorder %s19, 1
    %p36 = por %p34, %p35
    %p37 = scmp.ne.s32.totalorder %s29, %s32
    %p38 = scmp.eq.s32.totalorder %s19, 0
    %p39 = por %p37, %p38
    %p40 = scmp.ne.s32.totalorder %s29, %s32
    %p41 = scmp.eq.s32.totalorder %s24, 1
    %p42 = por %p40, %p41
    %p43 = scmp.ne.s32.totalorder %s32, %s33
    %p44 = scmp.eq.s32.totalorder %s24, 0
    %p45 = por %p43, %p44
    %p46 = scmp.ne.s32.totalorder %s32, %s33
    %p47 = scmp.eq.s32.totalorder %s25, 1
    %p48 = por %p46, %p47
    %p50 = scmp.ne.s32.totalorder %s33, %s49
    %p51 = scmp.eq.s32.totalorder %s25, 0
    %p52 = por %p50, %p51
    %s54 = sadd.s32 %s53, 1
    %p57 = scmp.eq.s32.totalorder %s19, 1
    %p58 = scmp.ne.s32.totalorder %s53, %s55
    %p59 = scmp.eq.s32.totalorder %s19, 0
    %p60 = por %p58, %p59
    %p61 = scmp.ne.s32.totalorder %s53, %s55
    %p62 = scmp.eq.s32.totalorder %s24, 1
    %p63 = por %p61, %p62
    %p64 = scmp.ne.s32.totalorder %s55, %s56
    %p65 = scmp.eq.s32.totalorder %s24, 0
    %p66 = por %p64, %p65
    %p67 = scmp.ne.s32.totalorder %s55, %s56
    %p68 = scmp.eq.s32.totalorder %s25, 1
    %p69 = por %p67, %p68
    %p71 = scmp.ne.s32.totalorder %s56, %s70
    %p72 = scmp.eq.s32.totalorder %s25, 0
    %p73 = por %p71, %p72
    %s75 = sadd.s32 %s74, 1
    %p78 = scmp.eq.s32.totalorder %s19, 1
    %p79 = scmp.ne.s32.totalorder %s74, %s76
    %p80 = scmp.eq.s32.totalorder %s19, 0
    %p81 = por %p79, %p80
    %p82 = scmp.ne.s32.totalorder %s74, %s76
    %p83 = scmp.eq.s32.totalorder %s24, 1
    %p84 = por %p82, %p83
    %p85 = scmp.ne.s32.totalorder %s76, %s77
    %p86 = scmp.eq.s32.totalorder %s24, 0
    %p87 = por %p85, %p86
    %p88 = scmp.ne.s32.totalorder %s76, %s77
    %p89 = scmp.eq.s32.totalorder %s25, 1
    %p90 = por %p88, %p89
    %p92 = scmp.ne.s32.totalorder %s77, %s91
    %p93 = scmp.eq.s32.totalorder %s25, 0
    %p94 = por %p92, %p93
    %s96 = sadd.s32 %s95, 1
    %p99 = scmp.eq.s32.totalorder %s19, 1
    %p100 = scmp.ne.s32.totalorder %s95, %s97
    %p101 = scmp.eq.s32.totalorder %s19, 0
    %p102 = por %p100, %p101
    %p103 = scmp.ne.s32.totalorder %s95, %s97
    %p104 = scmp.eq.s32.totalorder %s24, 1
    %p105 = por %p103, %p104
    %p106 = scmp.ne.s32.totalorder %s97, %s98
    %p107 = scmp.eq.s32.totalorder %s24, 0
    %p108 = por %p106, %p107
    %p109 = scmp.ne.s32.totalorder %s97, %s98
    %p110 = scmp.eq.s32.totalorder %s25, 1
    %p111 = por %p109, %p110
    %p113 = scmp.ne.s32.totalorder %s98, %s112
    %p114 = scmp.eq.s32.totalorder %s25, 0
    %p115 = por %p113, %p114
    %s117 = sadd.s32 %s116, 1
    %p120 = scmp.eq.s32.totalorder %s19, 1
    %p121 = scmp.ne.s32.totalorder %s116, %s118
    %p122 = scmp.eq.s32.totalorder %s19, 0
    %p123 = por %p121, %p122
    %p124 = scmp.ne.s32.totalorder %s116, %s118
    %p125 = scmp.eq.s32.totalorder %s24, 1
    %p126 = por %p124, %p125
    %p127 = scmp.ne.s32.totalorder %s118, %s119
    %p128 = scmp.eq.s32.totalorder %s24, 0
    %p129 = por %p127, %p128
    %p130 = scmp.ne.s32.totalorder %s118, %s119
    %p131 = scmp.eq.s32.totalorder %s25, 1
    %p132 = por %p130, %p131
    %p134 = scmp.ne.s32.totalorder %s119, %s133
    %p135 = scmp.eq.s32.totalorder %s25, 0
    %p136 = por %p134, %p135
    %s138 = sadd.s32 %s137, 1
    %p141 = scmp.eq.s32.totalorder %s19, 1
    %p142 = scmp.ne.s32.totalorder %s137, %s139
    %p143 = scmp.eq.s32.totalorder %s19, 0
    %p144 = por %p142, %p143
    %p145 = scmp.ne.s32.totalorder %s137, %s139
    %p146 = scmp.eq.s32.totalorder %s24, 1
    %p147 = por %p145, %p146
    %p148 = scmp.ne.s32.totalorder %s139, %s140
    %p149 = scmp.eq.s32.totalorder %s24, 0
    %p150 = por %p148, %p149
    %p151 = scmp.ne.s32.totalorder %s139, %s140
    %p152 = scmp.eq.s32.totalorder %s25, 1
    %p153 = por %p151, %p152
    %p155 = scmp.ne.s32.totalorder %s140, %s154
    %p156 = scmp.eq.s32.totalorder %s25, 0
    %p157 = por %p155, %p156
    %s159 = sadd.s32 %s158, 1
    %p162 = scmp.eq.s32.totalorder %s19, 1
    %p163 = scmp.ne.s32.totalorder %s158, %s160
    %p164 = scmp.eq.s32.totalorder %s19, 0
    %p165 = por %p163, %p164
    %p166 = scmp.ne.s32.totalorder %s158, %s160
    %p167 = scmp.eq.s32.totalorder %s24, 1
    %p168 = por %p166, %p167
    %p169 = scmp.ne.s32.totalorder %s160, %s161
    %p170 = scmp.eq.s32.totalorder %s24, 0
    %p171 = por %p169, %p170
    %p172 = scmp.ne.s32.totalorder %s160, %s161
    %p173 = scmp.eq.s32.totalorder %s25, 1
    %p174 = por %p172, %p173
    %p176 = scmp.ne.s32.totalorder %s161, %s175
    %p177 = scmp.eq.s32.totalorder %s25, 0
    %p178 = por %p176, %p177
    %s180 = sadd.s32 %s179, 1
    %p183 = scmp.eq.s32.totalorder %s19, 1
    %p184 = scmp.ne.s32.totalorder %s179, %s181
    %p185 = scmp.eq.s32.totalorder %s19, 0
    %p186 = por %p184, %p185
    %p187 = scmp.ne.s32.totalorder %s179, %s181
    %p188 = scmp.eq.s32.totalorder %s24, 1
    %p189 = por %p187, %p188
    %p190 = scmp.ne.s32.totalorder %s181, %s182
    %p191 = scmp.eq.s32.totalorder %s24, 0
    %p192 = por %p190, %p191
    %p193 = scmp.ne.s32.totalorder %s181, %s182
    %p194 = scmp.eq.s32.totalorder %s25, 1
    %p195 = por %p193, %p194
    %p197 = scmp.ne.s32.totalorder %s182, %s196
    %p198 = scmp.eq.s32.totalorder %s25, 0
    %p199 = por %p197, %p198
    %s201 = sadd.s32 %s200, 1
    %p204 = scmp.eq.s32.totalorder %s19, 1
    %p205 = scmp.ne.s32.totalorder %s200, %s202
    %p206 = scmp.eq.s32.totalorder %s19, 0
    %p207 = por %p205, %p206
    %p208 = scmp.ne.s32.totalorder %s200, %s202
    %p209 = scmp.eq.s32.totalorder %s24, 1
    %p210 = por %p208, %p209
    %p211 = scmp.ne.s32.totalorder %s202, %s203
    %p212 = scmp.eq.s32.totalorder %s24, 0
    %p213 = por %p211, %p212
    %p214 = scmp.ne.s32.totalorder %s202, %s203
    %p215 = scmp.eq.s32.totalorder %s25, 1
    %p216 = por %p214, %p215
    %p218 = scmp.ne.s32.totalorder %s203, %s217
    %p219 = scmp.eq.s32.totalorder %s25, 0
    %p220 = por %p218, %p219
    %s222 = sadd.s32 %s221, 1
    %p225 = scmp.eq.s32.totalorder %s19, 1
    %p226 = scmp.ne.s32.totalorder %s221, %s223
    %p227 = scmp.eq.s32.totalorder %s19, 0
    %p228 = por %p226, %p227
    %p229 = scmp.ne.s32.totalorder %s221, %s223
    %p230 = scmp.eq.s32.totalorder %s24, 1
    %p231 = por %p229, %p230
    %p232 = scmp.ne.s32.totalorder %s223, %s224
    %p233 = scmp.eq.s32.totalorder %s24, 0
    %p234 = por %p232, %p233
    %p235 = scmp.ne.s32.totalorder %s223, %s224
    %p236 = scmp.eq.s32.totalorder %s25, 1
    %p237 = por %p235, %p236
    %p239 = scmp.ne.s32.totalorder %s224, %s238
    %p240 = scmp.eq.s32.totalorder %s25, 0
    %p241 = por %p239, %p240
    %s243 = sadd.s32 %s242, 1
    %p246 = scmp.eq.s32.totalorder %s19, 1
    %p247 = scmp.ne.s32.totalorder %s242, %s244
    %p248 = scmp.eq.s32.totalorder %s19, 0
    %p249 = por %p247, %p248
    %p250 = scmp.ne.s32.totalorder %s242, %s244
    %p251 = scmp.eq.s32.totalorder %s24, 1
    %p252 = por %p250, %p251
    %p253 = scmp.ne.s32.totalorder %s244, %s245
    %p254 = scmp.eq.s32.totalorder %s24, 0
    %p255 = por %p253, %p254
    %p256 = scmp.ne.s32.totalorder %s244, %s245
    %p257 = scmp.eq.s32.totalorder %s25, 1
    %p258 = por %p256, %p257
    %p260 = scmp.ne.s32.totalorder %s245, %s259
    %p261 = scmp.eq.s32.totalorder %s25, 0
    %p262 = por %p260, %p261
    %s264 = sadd.s32 %s263, 1
    %p267 = scmp.eq.s32.totalorder %s19, 1
    %p268 = scmp.ne.s32.totalorder %s263, %s265
    %p269 = scmp.eq.s32.totalorder %s19, 0
    %p270 = por %p268, %p269
    %p271 = scmp.ne.s32.totalorder %s263, %s265
    %p272 = scmp.eq.s32.totalorder %s24, 1
    %p273 = por %p271, %p272
    %p274 = scmp.ne.s32.totalorder %s265, %s266
    %p275 = scmp.eq.s32.totalorder %s24, 0
    %p276 = por %p274, %p275
    %p277 = scmp.ne.s32.totalorder %s265, %s266
    %p278 = scmp.eq.s32.totalorder %s25, 1
    %p279 = por %p277, %p278
    %p281 = scmp.ne.s32.totalorder %s266, %s280
    %p282 = scmp.eq.s32.totalorder %s25, 0
    %p283 = por %p281, %p282
    %s285 = sadd.s32 %s284, 1
    %p288 = scmp.eq.s32.totalorder %s19, 1
    %p289 = scmp.ne.s32.totalorder %s284, %s286
    %p290 = scmp.eq.s32.totalorder %s19, 0
    %p291 = por %p289, %p290
    %p292 = scmp.ne.s32.totalorder %s284, %s286
    %p293 = scmp.eq.s32.totalorder %s24, 1
    %p294 = por %p292, %p293
    %p295 = scmp.ne.s32.totalorder %s286, %s287
    %p296 = scmp.eq.s32.totalorder %s24, 0
    %p297 = por %p295, %p296
    %p298 = scmp.ne.s32.totalorder %s286, %s287
    %p299 = scmp.eq.s32.totalorder %s25, 1
    %p300 = por %p298, %p299
    %p302 = scmp.ne.s32.totalorder %s287, %s301
    %p303 = scmp.eq.s32.totalorder %s25, 0
    %p304 = por %p302, %p303
    %s305 = ssub.s32 %s19, %s26
    %p306 = scmp.eq.s32.totalorder %s305, 0
    %s308 = sadd.s32 %s307, 1
    %s309 = scalar_select %p306, %s307, %s308
    %p312 = pneg %p306
    %p313 = scmp.eq.s32.totalorder %s19, 1
    %p314 = por %p312, %p313
    %p315 = scmp.ne.s32.totalorder %s307, %s310
    %p316 = scmp.eq.s32.totalorder %s19, 0
    %p317 = por %p315, %p316
    %p318 = scmp.ne.s32.totalorder %s307, %s310
    %p319 = scmp.eq.s32.totalorder %s24, 1
    %p320 = por %p318, %p319
    %p321 = scmp.ne.s32.totalorder %s310, %s311
    %p322 = scmp.eq.s32.totalorder %s24, 0
    %p323 = por %p321, %p322
    %p324 = scmp.ne.s32.totalorder %s310, %s311
    %p325 = scmp.eq.s32.totalorder %s25, 1
    %p326 = por %p324, %p325
    %p328 = scmp.ne.s32.totalorder %s311, %s327
    %p329 = scmp.eq.s32.totalorder %s25, 0
    %p330 = por %p328, %p329
    %p331 = scmp.le.s32.totalorder 1, %s19
    %p332 = scmp.lt.s32.totalorder %s19, 3
    %p333 = pnand %p331, %p332
    %p334 = pneg %p333
    // Predicated region
    $region9: #{context_block_pallas.1} parent=5 // pred_check
      _
    $region10: #{context_block_pallas.1} parent=5 // pred_check_branch
      %336 = sbr.rel (%p333) target = $region12
    $region11: #{context_block_pallas.1} parent=5 // pred_region
      %s337 = ssub.s32 %s19, 1
      // Predicated region
      $region13: #{context_block_pallas.1} parent=11 // pred_check
        %p338 = pneg %p66
      $region14: #{context_block_pallas.1} parent=11 // pred_check_branch
        %340 = sbr.rel (%p338) target = $region16
      $region15: #{context_block_pallas.1} parent=11 // pred_region
        _
      $region16: #{context_block_pallas.1} parent=11 // pred_fallthru
        _
      // Predicated region
      $region17: #{context_block_pallas.1} parent=11 // pred_check
        %p341 = pneg %p87
      $region18: #{context_block_pallas.1} parent=11 // pred_check_branch
        %343 = sbr.rel (%p341) target = $region20
      $region19: #{context_block_pallas.1} parent=11 // pred_region
        _
      $region20: #{context_block_pallas.1} parent=11 // pred_fallthru
        _
      // Predicated region
      $region21: #{context_block_pallas.1} parent=11 // pred_check
        %p344 = pneg %p108
      $region22: #{context_block_pallas.1} parent=11 // pred_check_branch
        %346 = sbr.rel (%p344) target = $region24
      $region23: #{context_block_pallas.1} parent=11 // pred_region
        _
      $region24: #{context_block_pallas.1} parent=11 // pred_fallthru
        _
      // Predicated region
      $region25: #{context_block_pallas.1} parent=11 // pred_check
        %p347 = pneg %p129
      $region26: #{context_block_pallas.1} parent=11 // pred_check_branch
        %349 = sbr.rel (%p347) target = $region28
      $region27: #{context_block_pallas.1} parent=11 // pred_region
        _
      $region28: #{context_block_pallas.1} parent=11 // pred_fallthru
        _
      // Predicated region
      $region29: #{context_block_pallas.1} parent=11 // pred_check
        %p350 = pneg %p150
      $region30: #{context_block_pallas.1} parent=11 // pred_check_branch
        %352 = sbr.rel (%p350) target = $region32
      $region31: #{context_block_pallas.1} parent=11 // pred_region
        _
      $region32: #{context_block_pallas.1} parent=11 // pred_fallthru
        _
      // Predicated region
      $region33: #{context_block_pallas.1} parent=11 // pred_check
        %p353 = pneg %p171
      $region34: #{context_block_pallas.1} parent=11 // pred_check_branch
        %355 = sbr.rel (%p353) target = $region36
      $region35: #{context_block_pallas.1} parent=11 // pred_region
        _
      $region36: #{context_block_pallas.1} parent=11 // pred_fallthru
        _
      // Predicated region
      $region37: #{context_block_pallas.1} parent=11 // pred_check
        %p356 = pneg %p192
      $region38: #{context_block_pallas.1} parent=11 // pred_check_branch
        %358 = sbr.rel (%p356) target = $region40
      $region39: #{context_block_pallas.1} parent=11 // pred_region
        _
      $region40: #{context_block_pallas.1} parent=11 // pred_fallthru
        _
      // Predicated region
      $region41: #{context_block_pallas.1} parent=11 // pred_check
        %p359 = pneg %p213
      $region42: #{context_block_pallas.1} parent=11 // pred_check_branch
        %361 = sbr.rel (%p359) target = $region44
      $region43: #{context_block_pallas.1} parent=11 // pred_region
        _
      $region44: #{context_block_pallas.1} parent=11 // pred_fallthru
        _
      // Predicated region
      $region45: #{context_block_pallas.1} parent=11 // pred_check
        %p362 = pneg %p234
      $region46: #{context_block_pallas.1} parent=11 // pred_check_branch
        %364 = sbr.rel (%p362) target = $region48
      $region47: #{context_block_pallas.1} parent=11 // pred_region
        _
      $region48: #{context_block_pallas.1} parent=11 // pred_fallthru
        _
      // Predicated region
      $region49: #{context_block_pallas.1} parent=11 // pred_check
        %p365 = pneg %p255
      $region50: #{context_block_pallas.1} parent=11 // pred_check_branch
        %367 = sbr.rel (%p365) target = $region52
      $region51: #{context_block_pallas.1} parent=11 // pred_region
        _
      $region52: #{context_block_pallas.1} parent=11 // pred_fallthru
        _
      // Predicated region
      $region53: #{context_block_pallas.1} parent=11 // pred_check
        %p368 = pneg %p276
      $region54: #{context_block_pallas.1} parent=11 // pred_check_branch
        %370 = sbr.rel (%p368) target = $region56
      $region55: #{context_block_pallas.1} parent=11 // pred_region
        _
      $region56: #{context_block_pallas.1} parent=11 // pred_fallthru
        _
      // Predicated region
      $region57: #{context_block_pallas.1} parent=11 // pred_check
        %p371 = pneg %p297
      $region58: #{context_block_pallas.1} parent=11 // pred_check_branch
        %373 = sbr.rel (%p371) target = $region60
      $region59: #{context_block_pallas.1} parent=11 // pred_region
        _
      $region60: #{context_block_pallas.1} parent=11 // pred_fallthru
        _
    $region12: #{context_block_pallas.1} parent=5 // pred_fallthru
      _
    %p374 = scmp.lt.s32.totalorder %s19, 2
    // Predicated region
    $region61: #{context_block_pallas.1} parent=5 // pred_check
      %p375 = pneg %p374
    $region62: #{context_block_pallas.1} parent=5 // pred_check_branch
      %377 = sbr.rel (%p375) target = $region64
    $region63: #{context_block_pallas.1} parent=5 // pred_region
      // Predicated region
      $region65: #{context_block_pallas.1} parent=63 // pred_check
        %p378 = pneg %p39
      $region66: #{context_block_pallas.1} parent=63 // pred_check_branch
        %380 = sbr.rel (%p378) target = $region68
      $region67: #{context_block_pallas.1} parent=63 // pred_region
        %p381 = scmp.lt.s32.totalorder %s19, 1
        %s382 = scalar_select %p381, %s19, 1
        %s383 = smul.addr %s382, 16
        %s384 = smul.addr %s383, 8
        %s385 = scalar_lea.vmem %s0, %s384
      $region68: #{context_block_pallas.1} parent=63 // pred_fallthru
        _
    $region64: #{context_block_pallas.1} parent=5 // pred_fallthru
      _
    %p386 = scmp.le.s32.totalorder 1, %s19
    %p387 = scmp.lt.s32.totalorder %s19, 3
    %p388 = pnand %p386, %p387
    %p389 = pneg %p388
    // Predicated region
    $region69: #{context_block_pallas.1} parent=5 // pred_check
      _
    $region70: #{context_block_pallas.1} parent=5 // pred_check_branch
      %391 = sbr.rel (%p388) target = $region72
    $region71: #{context_block_pallas.1} parent=5 // pred_region
      %s392 = ssub.s32 %s19, 1
      %p393 = scmp.lt.s32.totalorder %s24, 1
      %s394 = scalar_select %p393, %s24, 1
      %s395 = smul.addr %s394, 16
      %s396 = smul.addr %s395, 8
      %s397 = scalar_lea.vmem %s0, %s396
      %p398 = pneg %p45
      %p399 = pneg %p42
      %p400 = pneg %p66
      %p401 = pneg %p63
      %p402 = pneg %p87
      %p403 = pneg %p84
      %p404 = pneg %p108
      %p405 = pneg %p105
      %p406 = pneg %p129
      %p407 = pneg %p126
      %p408 = pneg %p150
      %p409 = pneg %p147
      %p410 = pneg %p171
      %p411 = pneg %p168
      %p412 = pneg %p192
      %p413 = pneg %p189
      %p414 = pneg %p213
      %p415 = pneg %p210
      %p416 = pneg %p234
      %p417 = pneg %p231
      %p418 = pneg %p255
      %p419 = pneg %p252
      %p420 = pneg %p276
      %p421 = pneg %p273
      %p422 = pneg %p297
      %p423 = pneg %p294
      %p424 = pneg %p323
      %p425 = pneg %p320
      %p426 = scmp.lt.s32.totalorder %s24, 1
      %s427 = scalar_select %p426, %s24, 1
      %s428 = smul.addr %s427, 16
      %s429 = smul.addr %s428, 8
      %s430 = scalar_lea.vmem %s13, %s429
      %p431 = scmp.lt.s32.totalorder %s24, 1
      %s432 = scalar_select %p431, %s24, 1
      %s433 = smul.addr %s432, 16
      %s434 = smul.addr %s433, 8
      %s435 = scalar_lea.vmem %s0, %s434
      %p436 = scmp.lt.s32.totalorder %s24, 1
      %s437 = scalar_select %p436, %s24, 1
      %s438 = smul.addr %s437, 16
      %s439 = smul.addr %s438, 8
      %s440 = scalar_lea.vmem %s13, %s439
      %v441 = vld [vmem:[%s435] sm:$0xff]
      %v442 = vld [vmem:[%s435 + $0x8] sm:$0xff]
      %v443 = vld [vmem:[%s435 + $0x10] sm:$0xff]
      %v444 = vld [vmem:[%s435 + $0x18] sm:$0xff]
      %v445 = vld [vmem:[%s435 + $0x20] sm:$0xff]
      %v446 = vld [vmem:[%s435 + $0x28] sm:$0xff]
      %v447 = vld [vmem:[%s435 + $0x30] sm:$0xff]
      %v448 = vld [vmem:[%s435 + $0x38] sm:$0xff]
      %v449 = vld [vmem:[%s435 + $0x40] sm:$0xff]
      %v450 = vld [vmem:[%s435 + $0x48] sm:$0xff]
      %v451 = vld [vmem:[%s435 + $0x50] sm:$0xff]
      %v452 = vld [vmem:[%s435 + $0x58] sm:$0xff]
      %v453 = vld [vmem:[%s435 + $0x60] sm:$0xff]
      %v454 = vld [vmem:[%s435 + $0x68] sm:$0xff]
      %v455 = vld [vmem:[%s435 + $0x70] sm:$0xff]
      %v456 = vld [vmem:[%s435 + $0x78] sm:$0xff]
      %v457 = vadd.f32 %v441, %v442
      %458 = vadd.xlane.f32.xlu0 %v457
      %v459 = vpop.xlane.xlu0 %458
      %v460 = vadd.f32 %v443, %v444
      %461 = vadd.xlane.f32.xlu0 %v460
      %v462 = vpop.xlane.xlu0 %461
      %v463 = vadd.f32 %v445, %v446
      %464 = vadd.xlane.f32.xlu0 %v463
      %v465 = vpop.xlane.xlu0 %464
      %v466 = vadd.f32 %v447, %v448
      %467 = vadd.xlane.f32.xlu0 %v466
      %v468 = vpop.xlane.xlu0 %467
      %v469 = vadd.f32 %v449, %v450
      %470 = vadd.xlane.f32.xlu0 %v469
      %v471 = vpop.xlane.xlu0 %470
      %v472 = vadd.f32 %v451, %v452
      %473 = vadd.xlane.f32.xlu0 %v472
      %v474 = vpop.xlane.xlu0 %473
      %v475 = vadd.f32 %v453, %v454
      %476 = vadd.xlane.f32.xlu0 %v475
      %v477 = vpop.xlane.xlu0 %476
      %v478 = vadd.f32 %v455, %v456
      %479 = vadd.xlane.f32.xlu0 %v478
      %v480 = vpop.xlane.xlu0 %479
      %v481 = vrcp.pop 256.0
      %v482 = vmul.f32 256.0, %v481
      %v483 = vsub.f32 1.0, %v482
      %v484 = vmul.f32 %v481, %v483
      %v485 = vadd.f32 %v481, %v484
      %vm486 = vweird.f32 %v481
      %v487 = vsel %vm486, %v481, %v485
      %v488 = vmul.f32 %v459, %v487
      %v489 = vmul.f32 %v462, %v487
      %v490 = vmul.f32 %v465, %v487
      %v491 = vmul.f32 %v468, %v487
      %v492 = vmul.f32 %v471, %v487
      %v493 = vmul.f32 %v474, %v487
      %v494 = vmul.f32 %v477, %v487
      %v495 = vmul.f32 %v480, %v487
      %v496 = vld [vmem:[%s1] sm:$0xff]
      %v497 = vld [vmem:[%s1 + $0x8] sm:$0xff]
      %v498 = vld [vmem:[%s1 + $0x10] sm:$0xff]
      %v499 = vld [vmem:[%s1 + $0x18] sm:$0xff]
      %v500 = vld [vmem:[%s1 + $0x20] sm:$0xff]
      %v501 = vld [vmem:[%s1 + $0x28] sm:$0xff]
      %v502 = vld [vmem:[%s1 + $0x30] sm:$0xff]
      %v503 = vld [vmem:[%s1 + $0x38] sm:$0xff]
      %v504 = vld [vmem:[%s2] sm:$0x1]
      %v505 = vld [vmem:[%s3] sm:$0x1]
      %v506 = vld [vmem:[%s4] sm:$0x1]
      %v507 = vld [vmem:[%s5] sm:$0xff]
      %v508 = vld [vmem:[%s5 + $0x8] sm:$0xff]
      %v509 = vld [vmem:[%s5 + $0x10] sm:$0xff]
      %v510 = vld [vmem:[%s5 + $0x18] sm:$0xff]
      %v511 = vld [vmem:[%s5 + $0x20] sm:$0xff]
      %v512 = vld [vmem:[%s5 + $0x28] sm:$0xff]
      %v513 = vld [vmem:[%s5 + $0x30] sm:$0xff]
      %v514 = vld [vmem:[%s5 + $0x38] sm:$0xff]
      %v515 = vld [vmem:[%s6] sm:$0xff]
      %v516 = vld [vmem:[%s6 + $0x8] sm:$0xff]
      %v517 = vld [vmem:[%s6 + $0x10] sm:$0xff]
      %v518 = vld [vmem:[%s6 + $0x18] sm:$0xff]
      %v519 = vld [vmem:[%s6 + $0x20] sm:$0xff]
      %v520 = vld [vmem:[%s6 + $0x28] sm:$0xff]
      %v521 = vld [vmem:[%s6 + $0x30] sm:$0xff]
      %v522 = vld [vmem:[%s6 + $0x38] sm:$0xff]
      %v523 = vmul.f32 %v496, %v488
      %v524 = vmul.f32 %v497, %v489
      %v525 = vmul.f32 %v498, %v490
      %v526 = vmul.f32 %v499, %v491
      %v527 = vmul.f32 %v500, %v492
      %v528 = vmul.f32 %v501, %v493
      %v529 = vmul.f32 %v502, %v494
      %v530 = vmul.f32 %v503, %v495
      %vm531 = vcmask 15360
      %v532 = vsel %vm531, %v523, 0.0
      %v533 = vsel %vm531, %v524, 0.0
      %v534 = vadd.f32 %v532, %v533
      %v535 = vsel %vm531, %v525, 0.0
      %v536 = vadd.f32 %v534, %v535
      %v537 = vsel %vm531, %v526, 0.0
      %v538 = vadd.f32 %v536, %v537
      %v539 = vsel %vm531, %v527, 0.0
      %v540 = vadd.f32 %v538, %v539
      %v541 = vsel %vm531, %v528, 0.0
      %v542 = vadd.f32 %v540, %v541
      %v543 = vsel %vm531, %v529, 0.0
      %v544 = vadd.f32 %v542, %v543
      %v545 = vsel %vm531, %v530, 0.0
      %v546 = vadd.f32 %v544, %v545
      %v547 = vrot.slane %v546, 4
      %v548 = vadd.f32 %v546, %v547
      %v549 = vrot.slane %v548, 2
      %v550 = vadd.f32 %v548, %v549
      %v551 = vrot.slane %v550, 1
      %v552 = vadd.f32 %v550, %v551
      %v553 = vadd.f32 %v552, %v504
      %vm554 = vcmask 8192
      %v555 = vsel %vm554, %v553, 0.0
      %556 = vadd.xlane.f32.xlu0 %v555
      %v557 = vpop.xlane.xlu0 %556
      %v558 = vrcp.pop 2.0
      %v559 = vmul.f32 2.0, %v558
      %v560 = vsub.f32 1.0, %v559
      %v561 = vmul.f32 %v558, %v560
      %v562 = vadd.f32 %v558, %v561
      %vm563 = vweird.f32 %v558
      %v564 = vsel %vm563, %v558, %v562
      %v565 = vmul.f32 %v557, %v564
      %v566 = vsub.f32 %v553, %v565
      %v567 = vmul.f32 %v566, %v566
      %v568 = vsel %vm554, %v567, 0.0
      %569 = vadd.xlane.f32.xlu0 %v568
      %v570 = vpop.xlane.xlu0 %569
      %v571 = vmul.f32 %v570, %v564
      %v572 = vadd.f32 %v571, 1e-05
      %v573 = vrsqrt.pop %v572
      %v574 = vmul.f32 %v573, %v572
      %v575 = vmul.f32 %v574, %v573
      %v576 = vmul.f32 0.5, %v575
      %v577 = vsub.f32 1.5, %v576
      %v578 = vmul.f32 %v573, %v577
      %vm579 = vweird.f32 %v572
      %vm580 = vweird.f32 %v573
      %vm581 = vmor %vm579, %vm580
      %v582 = vsel %vm581, %v573, %v578
      %v583 = vmul.f32 %v566, %v582
      %v584 = vmul.f32 %v583, %v505
      %v585 = vadd.f32 %v584, %v506
      %v586 = vmax.f32 %v585, 0.0
      %v587 = vperm.slane %v586, 0
      %v588 = vmul.f32 %v507, %v587
      %v589 = vmul.f32 %v508, %v587
      %v590 = vmul.f32 %v509, %v587
      %v591 = vmul.f32 %v510, %v587
      %v592 = vmul.f32 %v511, %v587
      %v593 = vmul.f32 %v512, %v587
      %v594 = vmul.f32 %v513, %v587
      %v595 = vmul.f32 %v514, %v587
      %v596 = vsel %vm531, %v588, 0.0
      %597 = vadd.xlane.f32.xlu0 %v596
      %v598 = vpop.xlane.xlu0 %597
      %v599 = vsel %vm531, %v589, 0.0
      %600 = vadd.xlane.f32.xlu0 %v599
      %v601 = vpop.xlane.xlu0 %600
      %v602 = vsel %vm531, %v590, 0.0
      %603 = vadd.xlane.f32.xlu0 %v602
      %v604 = vpop.xlane.xlu0 %603
      %v605 = vsel %vm531, %v591, 0.0
      %606 = vadd.xlane.f32.xlu0 %v605
      %v607 = vpop.xlane.xlu0 %606
      %v608 = vsel %vm531, %v592, 0.0
      %609 = vadd.xlane.f32.xlu0 %v608
      %v610 = vpop.xlane.xlu0 %609
      %v611 = vsel %vm531, %v593, 0.0
      %612 = vadd.xlane.f32.xlu0 %v611
      %v613 = vpop.xlane.xlu0 %612
      %v614 = vsel %vm531, %v594, 0.0
      %615 = vadd.xlane.f32.xlu0 %v614
      %v616 = vpop.xlane.xlu0 %615
      %v617 = vsel %vm531, %v595, 0.0
      %618 = vadd.xlane.f32.xlu0 %v617
      %v619 = vpop.xlane.xlu0 %618
      %v620 = vadd.f32 %v598, %v515
      %v621 = vadd.f32 %v601, %v516
      %v622 = vadd.f32 %v604, %v517
      %v623 = vadd.f32 %v607, %v518
      %v624 = vadd.f32 %v610, %v519
      %v625 = vadd.f32 %v613, %v520
      %v626 = vadd.f32 %v616, %v521
      %v627 = vadd.f32 %v619, %v522
      %v628 = vsub.f32 0.0, %v620
      %v629 = vsub.f32 0.0, %v621
      %v630 = vsub.f32 0.0, %v622
      %v631 = vsub.f32 0.0, %v623
      %v632 = vsub.f32 0.0, %v624
      %v633 = vsub.f32 0.0, %v625
      %v634 = vsub.f32 0.0, %v626
      %v635 = vsub.f32 0.0, %v627
      %v636 = vmul.f32 %v628, 1.442695
      %v637 = vpow.pop %v636
      %v638 = vmul.f32 %v629, 1.442695
      %v639 = vpow.pop %v638
      %v640 = vmul.f32 %v630, 1.442695
      %v641 = vpow.pop %v640
      %v642 = vmul.f32 %v631, 1.442695
      %v643 = vpow.pop %v642
      %v644 = vmul.f32 %v632, 1.442695
      %v645 = vpow.pop %v644
      %v646 = vmul.f32 %v633, 1.442695
      %v647 = vpow.pop %v646
      %v648 = vmul.f32 %v634, 1.442695
      %v649 = vpow.pop %v648
      %v650 = vmul.f32 %v635, 1.442695
      %v651 = vpow.pop %v650
      %v652 = vadd.f32 %v637, 1.0
      %v653 = vadd.f32 %v639, 1.0
      %v654 = vadd.f32 %v641, 1.0
      %v655 = vadd.f32 %v643, 1.0
      %v656 = vadd.f32 %v645, 1.0
      %v657 = vadd.f32 %v647, 1.0
      %v658 = vadd.f32 %v649, 1.0
      %v659 = vadd.f32 %v651, 1.0
      %v660 = vrcp.pop %v652
      %v661 = vmul.f32 %v652, %v660
      %v662 = vsub.f32 1.0, %v661
      %v663 = vmul.f32 %v660, %v662
      %v664 = vadd.f32 %v660, %v663
      %vm665 = vweird.f32 %v652
      %vm666 = vweird.f32 %v660
      %vm667 = vmor %vm665, %vm666
      %v668 = vsel %vm667, %v660, %v664
      %v669 = vand.u32 2147483647, %v652
      %vm670 = vcmp.eq.f32.partialorder %v669, 8.507059e+37
      %v671 = vand.u32 %v652, 2147483648
      %v672 = vor.u32 1.1754944e-38, %v671
      %v673 = vsel %vm670, %v672, %v668
      %v674 = vmul.f32 1.0, %v673
      %v675 = vrcp.pop %v653
      %v676 = vmul.f32 %v653, %v675
      %v677 = vsub.f32 1.0, %v676
      %v678 = vmul.f32 %v675, %v677
      %v679 = vadd.f32 %v675, %v678
      %vm680 = vweird.f32 %v653
      %vm681 = vweird.f32 %v675
      %vm682 = vmor %vm680, %vm681
      %v683 = vsel %vm682, %v675, %v679
      %v684 = vand.u32 2147483647, %v653
      %vm685 = vcmp.eq.f32.partialorder %v684, 8.507059e+37
      %v686 = vand.u32 %v653, 2147483648
      %v687 = vor.u32 1.1754944e-38, %v686
      %v688 = vsel %vm685, %v687, %v683
      %v689 = vmul.f32 1.0, %v688
      %v690 = vrcp.pop %v654
      %v691 = vmul.f32 %v654, %v690
      %v692 = vsub.f32 1.0, %v691
      %v693 = vmul.f32 %v690, %v692
      %v694 = vadd.f32 %v690, %v693
      %vm695 = vweird.f32 %v654
      %vm696 = vweird.f32 %v690
      %vm697 = vmor %vm695, %vm696
      %v698 = vsel %vm697, %v690, %v694
      %v699 = vand.u32 2147483647, %v654
      %vm700 = vcmp.eq.f32.partialorder %v699, 8.507059e+37
      %v701 = vand.u32 %v654, 2147483648
      %v702 = vor.u32 1.1754944e-38, %v701
      %v703 = vsel %vm700, %v702, %v698
      %v704 = vmul.f32 1.0, %v703
      %v705 = vrcp.pop %v655
      %v706 = vmul.f32 %v655, %v705
      %v707 = vsub.f32 1.0, %v706
      %v708 = vmul.f32 %v705, %v707
      %v709 = vadd.f32 %v705, %v708
      %vm710 = vweird.f32 %v655
      %vm711 = vweird.f32 %v705
      %vm712 = vmor %vm710, %vm711
      %v713 = vsel %vm712, %v705, %v709
      %v714 = vand.u32 2147483647, %v655
      %vm715 = vcmp.eq.f32.partialorder %v714, 8.507059e+37
      %v716 = vand.u32 %v655, 2147483648
      %v717 = vor.u32 1.1754944e-38, %v716
      %v718 = vsel %vm715, %v717, %v713
      %v719 = vmul.f32 1.0, %v718
      %v720 = vrcp.pop %v656
      %v721 = vmul.f32 %v656, %v720
      %v722 = vsub.f32 1.0, %v721
      %v723 = vmul.f32 %v720, %v722
      %v724 = vadd.f32 %v720, %v723
      %vm725 = vweird.f32 %v656
      %vm726 = vweird.f32 %v720
      %vm727 = vmor %vm725, %vm726
      %v728 = vsel %vm727, %v720, %v724
      %v729 = vand.u32 2147483647, %v656
      %vm730 = vcmp.eq.f32.partialorder %v729, 8.507059e+37
      %v731 = vand.u32 %v656, 2147483648
      %v732 = vor.u32 1.1754944e-38, %v731
      %v733 = vsel %vm730, %v732, %v728
      %v734 = vmul.f32 1.0, %v733
      %v735 = vrcp.pop %v657
      %v736 = vmul.f32 %v657, %v735
      %v737 = vsub.f32 1.0, %v736
      %v738 = vmul.f32 %v735, %v737
      %v739 = vadd.f32 %v735, %v738
      %vm740 = vweird.f32 %v657
      %vm741 = vweird.f32 %v735
      %vm742 = vmor %vm740, %vm741
      %v743 = vsel %vm742, %v735, %v739
      %v744 = vand.u32 2147483647, %v657
      %vm745 = vcmp.eq.f32.partialorder %v744, 8.507059e+37
      %v746 = vand.u32 %v657, 2147483648
      %v747 = vor.u32 1.1754944e-38, %v746
      %v748 = vsel %vm745, %v747, %v743
      %v749 = vmul.f32 1.0, %v748
      %v750 = vrcp.pop %v658
      %v751 = vmul.f32 %v658, %v750
      %v752 = vsub.f32 1.0, %v751
      %v753 = vmul.f32 %v750, %v752
      %v754 = vadd.f32 %v750, %v753
      %vm755 = vweird.f32 %v658
      %vm756 = vweird.f32 %v750
      %vm757 = vmor %vm755, %vm756
      %v758 = vsel %vm757, %v750, %v754
      %v759 = vand.u32 2147483647, %v658
      %vm760 = vcmp.eq.f32.partialorder %v759, 8.507059e+37
      %v761 = vand.u32 %v658, 2147483648
      %v762 = vor.u32 1.1754944e-38, %v761
      %v763 = vsel %vm760, %v762, %v758
      %v764 = vmul.f32 1.0, %v763
      %v765 = vrcp.pop %v659
      %v766 = vmul.f32 %v659, %v765
      %v767 = vsub.f32 1.0, %v766
      %v768 = vmul.f32 %v765, %v767
      %v769 = vadd.f32 %v765, %v768
      %vm770 = vweird.f32 %v659
      %vm771 = vweird.f32 %v765
      %vm772 = vmor %vm770, %vm771
      %v773 = vsel %vm772, %v765, %v769
      %v774 = vand.u32 2147483647, %v659
      %vm775 = vcmp.eq.f32.partialorder %v774, 8.507059e+37
      %v776 = vand.u32 %v659, 2147483648
      %v777 = vor.u32 1.1754944e-38, %v776
      %v778 = vsel %vm775, %v777, %v773
      %v779 = vmul.f32 1.0, %v778
      %v780 = vld [vmem:[%s7] sm:$0xff]
      %v781 = vld [vmem:[%s7 + $0x8] sm:$0xff]
      %v782 = vld [vmem:[%s7 + $0x10] sm:$0xff]
      %v783 = vld [vmem:[%s7 + $0x18] sm:$0xff]
      %v784 = vld [vmem:[%s7 + $0x20] sm:$0xff]
      %v785 = vld [vmem:[%s7 + $0x28] sm:$0xff]
      %v786 = vld [vmem:[%s7 + $0x30] sm:$0xff]
      %v787 = vld [vmem:[%s7 + $0x38] sm:$0xff]
      %v788 = vld [vmem:[%s8] sm:$0x1]
      %v789 = vld [vmem:[%s9] sm:$0x1]
      %v790 = vld [vmem:[%s10] sm:$0x1]
      %v791 = vld [vmem:[%s11] sm:$0xff]
      %v792 = vld [vmem:[%s11 + $0x8] sm:$0xff]
      %v793 = vld [vmem:[%s11 + $0x10] sm:$0xff]
      %v794 = vld [vmem:[%s11 + $0x18] sm:$0xff]
      %v795 = vld [vmem:[%s11 + $0x20] sm:$0xff]
      %v796 = vld [vmem:[%s11 + $0x28] sm:$0xff]
      %v797 = vld [vmem:[%s11 + $0x30] sm:$0xff]
      %v798 = vld [vmem:[%s11 + $0x38] sm:$0xff]
      %v799 = vld [vmem:[%s12] sm:$0xff]
      %v800 = vld [vmem:[%s12 + $0x8] sm:$0xff]
      %v801 = vld [vmem:[%s12 + $0x10] sm:$0xff]
      %v802 = vld [vmem:[%s12 + $0x18] sm:$0xff]
      %v803 = vld [vmem:[%s12 + $0x20] sm:$0xff]
      %v804 = vld [vmem:[%s12 + $0x28] sm:$0xff]
      %v805 = vld [vmem:[%s12 + $0x30] sm:$0xff]
      %v806 = vld [vmem:[%s12 + $0x38] sm:$0xff]
      %v807 = vmul.f32 %v780, %v488
      %v808 = vmul.f32 %v781, %v489
      %v809 = vmul.f32 %v782, %v490
      %v810 = vmul.f32 %v783, %v491
      %v811 = vmul.f32 %v784, %v492
      %v812 = vmul.f32 %v785, %v493
      %v813 = vmul.f32 %v786, %v494
      %v814 = vmul.f32 %v787, %v495
      %v815 = vsel %vm531, %v807, 0.0
      %v816 = vsel %vm531, %v808, 0.0
      %v817 = vadd.f32 %v815, %v816
      %v818 = vsel %vm531, %v809, 0.0
      %v819 = vadd.f32 %v817, %v818
      %v820 = vsel %vm531, %v810, 0.0
      %v821 = vadd.f32 %v819, %v820
      %v822 = vsel %vm531, %v811, 0.0
      %v823 = vadd.f32 %v821, %v822
      %v824 = vsel %vm531, %v812, 0.0
      %v825 = vadd.f32 %v823, %v824
      %v826 = vsel %vm531, %v813, 0.0
      %v827 = vadd.f32 %v825, %v826
      %v828 = vsel %vm531, %v814, 0.0
      %v829 = vadd.f32 %v827, %v828
      %v830 = vrot.slane %v829, 4
      %v831 = vadd.f32 %v829, %v830
      %v832 = vrot.slane %v831, 2
      %v833 = vadd.f32 %v831, %v832
      %v834 = vrot.slane %v833, 1
      %v835 = vadd.f32 %v833, %v834
      %v836 = vadd.f32 %v835, %v788
      %v837 = vsel %vm554, %v836, 0.0
      %838 = vadd.xlane.f32.xlu0 %v837
      %v839 = vpop.xlane.xlu0 %838
      %v840 = vmul.f32 %v839, %v564
      %v841 = vsub.f32 %v836, %v840
      %v842 = vmul.f32 %v841, %v841
      %v843 = vsel %vm554, %v842, 0.0
      %844 = vadd.xlane.f32.xlu0 %v843
      %v845 = vpop.xlane.xlu0 %844
      %v846 = vmul.f32 %v845, %v564
      %v847 = vadd.f32 %v846, 1e-05
      %v848 = vrsqrt.pop %v847
      %v849 = vmul.f32 %v848, %v847
      %v850 = vmul.f32 %v849, %v848
      %v851 = vmul.f32 0.5, %v850
      %v852 = vsub.f32 1.5, %v851
      %v853 = vmul.f32 %v848, %v852
      %vm854 = vweird.f32 %v847
      %vm855 = vweird.f32 %v848
      %vm856 = vmor %vm854, %vm855
      %v857 = vsel %vm856, %v848, %v853
      %v858 = vmul.f32 %v841, %v857
      %v859 = vmul.f32 %v858, %v789
      %v860 = vadd.f32 %v859, %v790
      %v861 = vmax.f32 %v860, 0.0
      %v862 = vperm.slane %v861, 0
      %v863 = vmul.f32 %v791, %v862
      %v864 = vmul.f32 %v792, %v862
      %v865 = vmul.f32 %v793, %v862
      %v866 = vmul.f32 %v794, %v862
      %v867 = vmul.f32 %v795, %v862
      %v868 = vmul.f32 %v796, %v862
      %v869 = vmul.f32 %v797, %v862
      %v870 = vmul.f32 %v798, %v862
      %v871 = vsel %vm531, %v863, 0.0
      %872 = vadd.xlane.f32.xlu0 %v871
      %v873 = vpop.xlane.xlu0 %872
      %v874 = vsel %vm531, %v864, 0.0
      %875 = vadd.xlane.f32.xlu0 %v874
      %v876 = vpop.xlane.xlu0 %875
      %v877 = vsel %vm531, %v865, 0.0
      %878 = vadd.xlane.f32.xlu0 %v877
      %v879 = vpop.xlane.xlu0 %878
      %v880 = vsel %vm531, %v866, 0.0
      %881 = vadd.xlane.f32.xlu0 %v880
      %v882 = vpop.xlane.xlu0 %881
      %v883 = vsel %vm531, %v867, 0.0
      %884 = vadd.xlane.f32.xlu0 %v883
      %v885 = vpop.xlane.xlu0 %884
      %v886 = vsel %vm531, %v868, 0.0
      %887 = vadd.xlane.f32.xlu0 %v886
      %v888 = vpop.xlane.xlu0 %887
      %v889 = vsel %vm531, %v869, 0.0
      %890 = vadd.xlane.f32.xlu0 %v889
      %v891 = vpop.xlane.xlu0 %890
      %v892 = vsel %vm531, %v870, 0.0
      %893 = vadd.xlane.f32.xlu0 %v892
      %v894 = vpop.xlane.xlu0 %893
      %v895 = vadd.f32 %v873, %v799
      %v896 = vadd.f32 %v876, %v800
      %v897 = vadd.f32 %v879, %v801
      %v898 = vadd.f32 %v882, %v802
      %v899 = vadd.f32 %v885, %v803
      %v900 = vadd.f32 %v888, %v804
      %v901 = vadd.f32 %v891, %v805
      %v902 = vadd.f32 %v894, %v806
      %904 = vset.pattern.permute.xlu0 0
      %905 = vperm.xlu0 %904, %v674
      %v906 = vpop.permute.xlu0 %905
      %909 = vset.pattern.permute.xlu0 0
      %910 = vperm.xlu0 %909, %v689
      %v911 = vpop.permute.xlu0 %910
      %914 = vset.pattern.permute.xlu0 0
      %915 = vperm.xlu0 %914, %v704
      %v916 = vpop.permute.xlu0 %915
      %919 = vset.pattern.permute.xlu0 0
      %920 = vperm.xlu0 %919, %v719
      %v921 = vpop.permute.xlu0 %920
      %924 = vset.pattern.permute.xlu0 0
      %925 = vperm.xlu0 %924, %v734
      %v926 = vpop.permute.xlu0 %925
      %929 = vset.pattern.permute.xlu0 0
      %930 = vperm.xlu0 %929, %v749
      %v931 = vpop.permute.xlu0 %930
      %934 = vset.pattern.permute.xlu0 0
      %935 = vperm.xlu0 %934, %v764
      %v936 = vpop.permute.xlu0 %935
      %939 = vset.pattern.permute.xlu0 0
      %940 = vperm.xlu0 %939, %v779
      %v941 = vpop.permute.xlu0 %940
      %v943 = vmul.f32 %v441, %v906
      %v944 = vmul.f32 %v442, %v906
      %v945 = vmul.f32 %v443, %v911
      %v946 = vmul.f32 %v444, %v911
      %v947 = vmul.f32 %v445, %v916
      %v948 = vmul.f32 %v446, %v916
      %v949 = vmul.f32 %v447, %v921
      %v950 = vmul.f32 %v448, %v921
      %v951 = vmul.f32 %v449, %v926
      %v952 = vmul.f32 %v450, %v926
      %v953 = vmul.f32 %v451, %v931
      %v954 = vmul.f32 %v452, %v931
      %v955 = vmul.f32 %v453, %v936
      %v956 = vmul.f32 %v454, %v936
      %v957 = vmul.f32 %v455, %v941
      %v958 = vmul.f32 %v456, %v941
      %960 = vset.pattern.permute.xlu0 0
      %961 = vperm.xlu0 %960, %v895
      %v962 = vpop.permute.xlu0 %961
      %965 = vset.pattern.permute.xlu0 0
      %966 = vperm.xlu0 %965, %v896
      %v967 = vpop.permute.xlu0 %966
      %970 = vset.pattern.permute.xlu0 0
      %971 = vperm.xlu0 %970, %v897
      %v972 = vpop.permute.xlu0 %971
      %975 = vset.pattern.permute.xlu0 0
      %976 = vperm.xlu0 %975, %v898
      %v977 = vpop.permute.xlu0 %976
      %980 = vset.pattern.permute.xlu0 0
      %981 = vperm.xlu0 %980, %v899
      %v982 = vpop.permute.xlu0 %981
      %985 = vset.pattern.permute.xlu0 0
      %986 = vperm.xlu0 %985, %v900
      %v987 = vpop.permute.xlu0 %986
      %990 = vset.pattern.permute.xlu0 0
      %991 = vperm.xlu0 %990, %v901
      %v992 = vpop.permute.xlu0 %991
      %995 = vset.pattern.permute.xlu0 0
      %996 = vperm.xlu0 %995, %v902
      %v997 = vpop.permute.xlu0 %996
      %v999 = vadd.f32 %v943, %v962
      %v1000 = vadd.f32 %v944, %v962
      %v1001 = vadd.f32 %v945, %v967
      %v1002 = vadd.f32 %v946, %v967
      %v1003 = vadd.f32 %v947, %v972
      %v1004 = vadd.f32 %v948, %v972
      %v1005 = vadd.f32 %v949, %v977
      %v1006 = vadd.f32 %v950, %v977
      %v1007 = vadd.f32 %v951, %v982
      %v1008 = vadd.f32 %v952, %v982
      %v1009 = vadd.f32 %v953, %v987
      %v1010 = vadd.f32 %v954, %v987
      %v1011 = vadd.f32 %v955, %v992
      %v1012 = vadd.f32 %v956, %v992
      %v1013 = vadd.f32 %v957, %v997
      %v1014 = vadd.f32 %v958, %v997
      %1015 = vst [vmem:[%s440] sm:$0xff] %v999
      %1016 = vst [vmem:[%s440 + $0x8] sm:$0xff] %v1000
      %1017 = vst [vmem:[%s440 + $0x10] sm:$0xff] %v1001
      %1018 = vst [vmem:[%s440 + $0x18] sm:$0xff] %v1002
      %1019 = vst [vmem:[%s440 + $0x20] sm:$0xff] %v1003
      %1020 = vst [vmem:[%s440 + $0x28] sm:$0xff] %v1004
      %1021 = vst [vmem:[%s440 + $0x30] sm:$0xff] %v1005
      %1022 = vst [vmem:[%s440 + $0x38] sm:$0xff] %v1006
      %1023 = vst [vmem:[%s440 + $0x40] sm:$0xff] %v1007
      %1024 = vst [vmem:[%s440 + $0x48] sm:$0xff] %v1008
      %1025 = vst [vmem:[%s440 + $0x50] sm:$0xff] %v1009
      %1026 = vst [vmem:[%s440 + $0x58] sm:$0xff] %v1010
      %1027 = vst [vmem:[%s440 + $0x60] sm:$0xff] %v1011
      %1028 = vst [vmem:[%s440 + $0x68] sm:$0xff] %v1012
      %1029 = vst [vmem:[%s440 + $0x70] sm:$0xff] %v1013
      %1030 = vst [vmem:[%s440 + $0x78] sm:$0xff] %v1014
      %p1031 = scmp.lt.s32.totalorder %s24, 1
      %s1032 = scalar_select %p1031, %s24, 1
      %s1033 = smul.addr %s1032, 16
      %s1034 = smul.addr %s1033, 8
      %s1035 = scalar_lea.vmem %s13, %s1034
      // Predicated region
      $region73: #{context_block_pallas.1} parent=71 // pred_check
        %p1036 = pneg %p320
      $region74: #{context_block_pallas.1} parent=71 // pred_check_branch
        %1038 = sbr.rel (%p1036) target = $region76
      $region75: #{context_block_pallas.1} parent=71 // pred_region
        _
      $region76: #{context_block_pallas.1} parent=71 // pred_fallthru
        _
    $region72: #{context_block_pallas.1} parent=5 // pred_fallthru
      _
    %p1039 = scmp.le.s32.totalorder 2, %s19
    // Predicated region
    $region77: #{context_block_pallas.1} parent=5 // pred_check
      %p1040 = pneg %p1039
    $region78: #{context_block_pallas.1} parent=5 // pred_check_branch
      %1042 = sbr.rel (%p1040) target = $region80
    $region79: #{context_block_pallas.1} parent=5 // pred_region
      %s1043 = ssub.s32 %s19, 2
      // Predicated region
      $region81: #{context_block_pallas.1} parent=79 // pred_check
        %p1044 = pneg %p326
      $region82: #{context_block_pallas.1} parent=79 // pred_check_branch
        %1046 = sbr.rel (%p1044) target = $region84
      $region83: #{context_block_pallas.1} parent=79 // pred_region
        %p1047 = scmp.lt.s32.totalorder %s25, 1
        %s1048 = scalar_select %p1047, %s25, 1
        %s1049 = smul.addr %s1048, 16
        %s1050 = smul.addr %s1049, 8
        %s1051 = scalar_lea.vmem %s13, %s1050
      $region84: #{context_block_pallas.1} parent=79 // pred_fallthru
        _
    $region80: #{context_block_pallas.1} parent=5 // pred_fallthru
      _
  $region6: #{context_block_pallas.1} parent=0 // loop_footer
    %s23 = sadd.s32 1, %s19
  $region7: #{context_block_pallas.1} parent=0 // loop_footer_branch
    %18 = sbr.rel target = $region3
  $region8: #{context_block_pallas.1} parent=0 // loop_exit
    _

</llo_original>
